<compile_context>
chip_gen: v5e
topology: v5e:2x2
jax: 0.10.0
libtpu: 0.0.40
codegen_flags: <defaults>
</compile_context>

<pallas_src>
import jax
import jax.numpy as jnp
from jax.experimental import pallas as pl
from jax.experimental.pallas import tpu as pltpu


# --------------------------------------------------------------------------- #
# Kernels
# --------------------------------------------------------------------------- #
def _stats_kernel(x_ref, o_ref, sum_ref, sq_ref):
    """Per-(b, hw-tile) partial sum / sum-of-squares, reduced over the d axis."""
    d = pl.program_id(2)

    @pl.when(d == 0)
    def _():
        sum_ref[...] = jnp.zeros_like(sum_ref)
        sq_ref[...] = jnp.zeros_like(sq_ref)

    x = x_ref[...].astype(jnp.float32)                     # (C, hw_tile)
    sum_ref[...] += jnp.sum(x, axis=1, keepdims=True)
    sq_ref[...] += jnp.sum(x * x, axis=1, keepdims=True)

    @pl.when(d == pl.num_programs(2) - 1)
    def _():
        o_ref[:, 0:1] = sum_ref[...]
        o_ref[:, 1:2] = sq_ref[...]


def _ccvnorm_kernel(x_ref, cats_ref, inv_ref, stats_ref, cwcb_ref, affp_ref,
                    out_ref, catcb_ref):
    """Normalize + categorical hierarchical conditional affine, one (b, hw, d) tile."""
    C = out_ref.shape[0]

    # Categorical mixing depends only on (b, hw): compute the fused
    # [cw; cb] @ cats matmul once at d == 0 (d is the innermost, "arbitrary"
    # grid axis) into VMEM scratch and reuse it for every disparity slice.
    @pl.when(pl.program_id(2) == 0)
    def _():
        cats = cats_ref[...].astype(jnp.float32)           # (K, hw_tile)
        catcb_ref[...] = jnp.dot(cwcb_ref[...], cats,      # (2C, hw_tile)
                                 preferred_element_type=jnp.float32)

    x = x_ref[...].astype(jnp.float32)                     # (C, hw_tile)
    stats = stats_ref[...]                                 # (C, 2): [mean, rsqrt(var+eps)]
    normed = (x - stats[:, 0:1]) * stats[:, 1:2]

    catw = catcb_ref[0:C, :]                               # (C, hw_tile)
    catb = catcb_ref[C:2 * C, :]

    affp = affp_ref[...]                                   # (C, 6) for this d
    www, wwb = affp[:, 0:1], affp[:, 1:2]
    bww, bwb = affp[:, 2:3], affp[:, 3:4]
    iw, ib = affp[:, 4:5], affp[:, 5:6]

    inv = inv_ref[...] != 0.0                              # (1, hw_tile) bool
    weight = jnp.where(inv, iw, catw * www + wwb)
    bias = jnp.where(inv, ib, catb * bww + bwb)
    out_ref[...] = (normed * weight + bias).astype(out_ref.dtype)


# --------------------------------------------------------------------------- #
# Wrapper
# --------------------------------------------------------------------------- #
def _choose_hw_tile(hw, target=4096):
    """Largest multiple-of-128 divisor of hw that is <= target (else hw itself)."""
    if hw <= target:
        return hw
    t = (target // 128) * 128
    while t >= 128:
        if hw % t == 0:
            return t
        t -= 128
    # Fallback: full spatial extent (block == full dim satisfies the (8,128) rule).
    return hw


def categorical_hier_ccvnorm(x, cats, params, *, eps=2e-5, training=True,
                             momentum=0.1, hw_tile_target=4096,
                             vmem_limit_bytes=32 * 1024 * 1024,
                             return_updated_running_stats=False):
    """Forward pass.  x: (B, C, D, H, W), cats: (B, K, H, W) with K == D.

    The PyTorch module's `feats` argument is cloned but never used, so omitted.
    """
    B, C, D, H, W = x.shape
    _, K, _, _ = cats.shape
    assert K == D, "num_cats must equal the disparity dim for broadcasting (as in GCNet)"
    HW = H * W

    hw_tile = _choose_hw_tile(HW, hw_tile_target)
    n_hw = HW // hw_tile

    # Free reshapes (trailing contiguous dims merged) -- no transposes, no upcasts.
    x_flat = x.reshape(B, C, D * HW)
    cats_flat = cats.reshape(B, K, HW)
    inv = (cats_flat[0, 0:1, :] == -1).astype(jnp.float32)          # (1, HW)

    cparams = pltpu.CompilerParams(
        dimension_semantics=("parallel", "parallel", "arbitrary"),
        vmem_limit_bytes=vmem_limit_bytes)

    if training:
        partials = pl.pallas_call(
            _stats_kernel,
            out_shape=jax.ShapeDtypeStruct((B, n_hw, C, 2), jnp.float32),
            grid=(B, n_hw, D),
            in_specs=[pl.BlockSpec((None, C, hw_tile),
                                   lambda b, s, d: (b, 0, d * n_hw + s))],
            out_specs=pl.BlockSpec((None, None, C, 2),
                                   lambda b, s, d: (b, s, 0, 0)),
            scratch_shapes=[pltpu.VMEM((C, 1), jnp.float32),
                            pltpu.VMEM((C, 1), jnp.float32)],
            compiler_params=cparams,
        )(x_flat)
        totals = jnp.sum(partials, axis=(0, 1))                     # (C, 2)
        n = float(B * D * HW)
        mean = totals[:, 0] / n
        var = jnp.maximum(totals[:, 1] / n - mean * mean, 0.0)      # biased (torch BN)
    else:
        mean = params["running_mean"].astype(jnp.float32)
        var = params["running_var"].astype(jnp.float32)

    scale = jax.lax.rsqrt(var + eps)
    stats = jnp.stack([mean, scale], axis=1)                        # (C, 2)

    # Fused categorical mixing weights [cw; cb] -> single (2C, K) MXU operand.
    cw = params["catcbn_weight"][0].astype(jnp.float32)             # (C, K)
    cb = params["catcbn_bias"][0].astype(jnp.float32)               # (C, K)
    cwcb = jnp.concatenate([cw, cb], axis=0)                        # (2C, K)

    # Per-disparity affine params packed as (D, C, 6):
    # [weight_weight, weight_bias, bias_weight, bias_bias, invalid_w, invalid_b]
    affp = jnp.stack([
        params["catcbn_weight_weight"][0],
        params["catcbn_weight_bias"][0],
        params["catcbn_bias_weight"][0],
        params["catcbn_bias_bias"][0],
        params["invalid_weight"][0, :, :, 0],
        params["invalid_bias"][0, :, :, 0],
    ], axis=-1).astype(jnp.float32)                                 # (C, K, 6)
    affp = jnp.transpose(affp, (1, 0, 2))                           # (D, C, 6) -- tiny

    out_flat = pl.pallas_call(
        _ccvnorm_kernel,
        out_shape=jax.ShapeDtypeStruct((B, C, D * HW), x.dtype),
        grid=(B, n_hw, D),
        in_specs=[
            pl.BlockSpec((None, C, hw_tile),
                         lambda b, s, d: (b, 0, d * n_hw + s)),     # x tile
            pl.BlockSpec((None, K, hw_tile),
                         lambda b, s, d: (b, 0, s)),                # cats (const over d)
            pl.BlockSpec((1, hw_tile), lambda b, s, d: (0, s)),     # invalid mask
            pl.BlockSpec((C, 2), lambda b, s, d: (0, 0)),           # mean / rsqrt(var+eps)
            pl.BlockSpec((2 * C, K), lambda b, s, d: (0, 0)),       # [cw; cb]
            pl.BlockSpec((None, C, 6), lambda b, s, d: (d, 0, 0)),  # per-d affine
        ],
        out_specs=pl.BlockSpec((None, C, hw_tile),
                               lambda b, s, d: (b, 0, d * n_hw + s)),
        scratch_shapes=[pltpu.VMEM((2 * C, hw_tile), jnp.float32)],
        compiler_params=cparams,
    )(x_flat, cats_flat, inv, stats, cwcb, affp)

    out = out_flat.reshape(B, C, D, H, W)

    if training and return_updated_running_stats:
        # Functional equivalent of the in-place running-stat EMA buffer update.
        # TODO(synk): `momentum is None` (cumulative average via num_batches_tracked)
        # is not reproduced; only the fixed-momentum case is.
        n_elems = B * D * HW
        unbiased_var = var * (n_elems / max(n_elems - 1, 1))
        new_rm = (1.0 - momentum) * params["running_mean"] + momentum * mean
        new_rv = (1.0 - momentum) * params["running_var"] + momentum * unbiased_var
        return out, new_rm, new_rv
    return out


# --------------------------------------------------------------------------- #
# Parameter init + pure-JAX reference
# --------------------------------------------------------------------------- #
def init_params(key, num_features, num_cats):
    """Deterministic parameter init (same shapes as the PyTorch module's __init__)."""
    C, K = num_features, num_cats
    ks = jax.random.split(key, 8)

    def w(k, shape):
        return 1.0 + 0.1 * jax.random.normal(k, shape, jnp.float32)

    def b(k, shape):
        return 0.1 * jax.random.normal(k, shape, jnp.float32)

    return {
        "catcbn_weight_weight": w(ks[0], (1, C, K)),
        "catcbn_weight_bias": b(ks[1], (1, C, K)),
        "catcbn_bias_weight": w(ks[2], (1, C, K)),
        "catcbn_bias_bias": b(ks[3], (1, C, K)),
        "catcbn_weight": w(ks[4], (1, C, K)),
        "catcbn_bias": b(ks[5], (1, C, K)),
        "invalid_weight": w(ks[6], (1, C, K, 1)),
        "invalid_bias": b(ks[7], (1, C, K, 1)),
        "running_mean": jnp.zeros((C,), jnp.float32),
        "running_var": jnp.ones((C,), jnp.float32),
    }


def reference_forward(x, cats, params, eps=2e-5, training=True):
    """Pure-JAX mirror of the PyTorch forward (for correctness checking)."""
    if training:
        mean = jnp.mean(x, axis=(0, 2, 3, 4))
        var = jnp.mean(jnp.square(x), axis=(0, 2, 3, 4)) - mean * mean
    else:
        mean, var = params["running_mean"], params["running_var"]
    out = (x - mean[None, :, None, None, None]) * jax.lax.rsqrt(
        var[None, :, None, None, None] + eps)

    invalid = (cats[0, 0] == -1).astype(jnp.float32)[None, None, None]   # (1,1,1,H,W)
    cw, cb = params["catcbn_weight"], params["catcbn_bias"]
    catw = jnp.sum(cw[:, :, :, None, None] * cats[:, None], axis=2, keepdims=True)
    catb = jnp.sum(cb[:, :, :, None, None] * cats[:, None], axis=2, keepdims=True)
    weight = (catw * params["catcbn_weight_weight"][..., None, None]
              + params["catcbn_weight_bias"][..., None, None])
    weight = weight * (1 - invalid) + params["invalid_weight"][..., None] * invalid
    bias = (catb * params["catcbn_bias_weight"][..., None, None]
            + params["catcbn_bias_bias"][..., None, None])
    bias = bias * (1 - invalid) + params["invalid_bias"][..., None] * invalid
    return out * weight + bias


if __name__ == "__main__":
    key = jax.random.PRNGKey(0)
    k_x, k_cats, k_params = jax.random.split(key, 3)

    B, C, D, H, W = 2, 8, 8, 16, 16   # num_features=8, num_cats=D=8
    K = D

    x = jax.random.normal(k_x, (B, C, D, H, W), jnp.float32)
    cats = jax.random.normal(k_cats, (B, K, H, W), jnp.float32)
    # Mark a patch of pixels invalid (module checks cats[0, 0] == -1 exactly).
    cats = cats.at[0, 0, :4, :4].set(-1.0)

    params = init_params(k_params, C, K)

    out = categorical_hier_ccvnorm(x, cats, params, eps=2e-5, training=True)
    out = jax.block_until_ready(out)

    ref = reference_forward(x, cats, params, eps=2e-5, training=True)
    max_err = float(jnp.max(jnp.abs(out - ref)))
    assert max_err < 1e-3, f"mismatch vs reference: {max_err}"

    # Also exercise the eval-mode (running-stats) path once.
    out_eval = jax.block_until_ready(
        categorical_hier_ccvnorm(x, cats, params, eps=2e-5, training=False))
    ref_eval = reference_forward(x, cats, params, eps=2e-5, training=False)
    max_err_eval = float(jnp.max(jnp.abs(out_eval - ref_eval)))
    assert max_err_eval < 1e-3, f"eval mismatch vs reference: {max_err_eval}"

    print("KERNEL_OK")
</pallas_src>

<mosaic_0001>
module attributes {stable_mosaic.version = 11 : i64} {
  func.func @_stats_kernel(%arg0: i32, %arg1: i32, %arg2: i32, %arg3: memref<1x8x256xf32, #tpu.memory_space<vmem>>, %arg4: memref<1x1x8x2xf32, #tpu.memory_space<vmem>>, %arg5: memref<8x1xf32, #tpu.memory_space<vmem>>, %arg6: memref<8x1xf32, #tpu.memory_space<vmem>>) attributes {dimension_semantics = [#tpu.dimension_semantics<parallel>, #tpu.dimension_semantics<parallel>, #tpu.dimension_semantics<arbitrary>], iteration_bounds = array<i64: 2, 1, 8>, scalar_prefetch = 0 : i64, scratch_operands = 2 : i64, tpu.core_type = #tpu.core_type<tc>, window_params = [{transform_indices = @transform_0, window_bounds = array<i64: 1, 8, 256>}, {transform_indices = @transform_1, window_bounds = array<i64: 1, 1, 8, 2>}]} {
    %c0_i32 = arith.constant 0 : i32
    %0 = arith.cmpi eq, %arg2, %c0_i32 : i32
    %1 = arith.extui %0 : i1 to i32
    %c0_i32_0 = arith.constant 0 : i32
    %2 = arith.cmpi ne, %1, %c0_i32_0 : i32
    scf.if %2 {
      %cst_13 = arith.constant 0.000000e+00 : f32
      %19 = vector.broadcast %cst_13 : f32 to vector<8x1xf32>
      %c0_14 = arith.constant 0 : index
      %c0_15 = arith.constant 0 : index
      %20 = vector.load %arg5[%c0_14, %c0_15] : memref<8x1xf32, #tpu.memory_space<vmem>>, vector<8x1xf32>
      tpu.vector_store %arg5[%c0_14, %c0_15], %19 {strides = array<i32>} : memref<8x1xf32, #tpu.memory_space<vmem>>, vector<8x1xf32>,
      %cst_16 = arith.constant 0.000000e+00 : f32
      %21 = vector.broadcast %cst_16 : f32 to vector<8x1xf32>
      %c0_17 = arith.constant 0 : index
      %c0_18 = arith.constant 0 : index
      %22 = vector.load %arg6[%c0_17, %c0_18] : memref<8x1xf32, #tpu.memory_space<vmem>>, vector<8x1xf32>
      tpu.vector_store %arg6[%c0_17, %c0_18], %21 {strides = array<i32>} : memref<8x1xf32, #tpu.memory_space<vmem>>, vector<8x1xf32>,
    } else {
    }
    %c0 = arith.constant 0 : index
    %c0_1 = arith.constant 0 : index
    %c0_2 = arith.constant 0 : index
    %3 = vector.load %arg3[%c0, %c0_1, %c0_2] : memref<1x8x256xf32, #tpu.memory_space<vmem>>, vector<1x8x256xf32>
    %4 = vector.shape_cast %3 : vector<1x8x256xf32> to vector<8x256xf32>
    %c0_3 = arith.constant 0 : index
    %c0_4 = arith.constant 0 : index
    %5 = vector.load %arg5[%c0_3, %c0_4] : memref<8x1xf32, #tpu.memory_space<vmem>>, vector<8x1xf32>
    %cst = arith.constant dense<0.000000e+00> : vector<8xf32>
    %6 = vector.multi_reduction <add>, %4, %cst [1] : vector<8x256xf32> to vector<8xf32>
    %7 = vector.shape_cast %6 : vector<8xf32> to vector<8x1xf32>
    %8 = arith.addf %5, %7 : vector<8x1xf32>
    %c0_5 = arith.constant 0 : index
    %c0_6 = arith.constant 0 : index
    %9 = vector.load %arg5[%c0_5, %c0_6] : memref<8x1xf32, #tpu.memory_space<vmem>>, vector<8x1xf32>
    tpu.vector_store %arg5[%c0_5, %c0_6], %8 {strides = array<i32>} : memref<8x1xf32, #tpu.memory_space<vmem>>, vector<8x1xf32>,
    %c0_7 = arith.constant 0 : index
    %c0_8 = arith.constant 0 : index
    %10 = vector.load %arg6[%c0_7, %c0_8] : memref<8x1xf32, #tpu.memory_space<vmem>>, vector<8x1xf32>
    %11 = arith.mulf %4, %4 : vector<8x256xf32>
    %cst_9 = arith.constant dense<0.000000e+00> : vector<8xf32>
    %12 = vector.multi_reduction <add>, %11, %cst_9 [1] : vector<8x256xf32> to vector<8xf32>
    %13 = vector.shape_cast %12 : vector<8xf32> to vector<8x1xf32>
    %14 = arith.addf %10, %13 : vector<8x1xf32>
    %c0_10 = arith.constant 0 : index
    %c0_11 = arith.constant 0 : index
    %15 = vector.load %arg6[%c0_10, %c0_11] : memref<8x1xf32, #tpu.memory_space<vmem>>, vector<8x1xf32>
    tpu.vector_store %arg6[%c0_10, %c0_11], %14 {strides = array<i32>} : memref<8x1xf32, #tpu.memory_space<vmem>>, vector<8x1xf32>,
    %c7_i32 = arith.constant 7 : i32
    %16 = arith.cmpi eq, %arg2, %c7_i32 : i32
    %17 = arith.extui %16 : i1 to i32
    %c0_i32_12 = arith.constant 0 : i32
    %18 = arith.cmpi ne, %17, %c0_i32_12 : i32
    scf.if %18 {
      %c0_13 = arith.constant 0 : index
      %c0_14 = arith.constant 0 : index
      %19 = vector.load %arg5[%c0_13, %c0_14] : memref<8x1xf32, #tpu.memory_space<vmem>>, vector<8x1xf32>
      %c0_15 = arith.constant 0 : index
      %c0_16 = arith.constant 0 : index
      %c0_17 = arith.constant 0 : index
      %c0_18 = arith.constant 0 : index
      %20 = vector.load %arg4[%c0_15, %c0_16, %c0_17, %c0_18] : memref<1x1x8x2xf32, #tpu.memory_space<vmem>>, vector<1x1x8x1xf32>
      %21 = vector.shape_cast %20 : vector<1x1x8x1xf32> to vector<8x1xf32>
      %22 = vector.shape_cast %19 : vector<8x1xf32> to vector<1x1x8x1xf32>
      tpu.vector_store %arg4[%c0_15, %c0_16, %c0_17, %c0_18], %22 {strides = array<i32>} : memref<1x1x8x2xf32, #tpu.memory_space<vmem>>, vector<1x1x8x1xf32>,
      %c0_19 = arith.constant 0 : index
      %c0_20 = arith.constant 0 : index
      %23 = vector.load %arg6[%c0_19, %c0_20] : memref<8x1xf32, #tpu.memory_space<vmem>>, vector<8x1xf32>
      %c0_21 = arith.constant 0 : index
      %c0_22 = arith.constant 0 : index
      %c0_23 = arith.constant 0 : index
      %c1 = arith.constant 1 : index
      %24 = vector.load %arg4[%c0_21, %c0_22, %c0_23, %c1] : memref<1x1x8x2xf32, #tpu.memory_space<vmem>>, vector<1x1x8x1xf32>
      %25 = vector.shape_cast %24 : vector<1x1x8x1xf32> to vector<8x1xf32>
      %26 = vector.shape_cast %23 : vector<8x1xf32> to vector<1x1x8x1xf32>
      tpu.vector_store %arg4[%c0_21, %c0_22, %c0_23, %c1], %26 {strides = array<i32>} : memref<1x1x8x2xf32, #tpu.memory_space<vmem>>, vector<1x1x8x1xf32>,
    } else {
    }
    return
  }
  func.func @transform_0(%arg0: i32, %arg1: i32, %arg2: i32) -> (i32, i32, i32) {
    %c1_i32 = arith.constant 1 : i32
    %0 = arith.muli %arg2, %c1_i32 : i32
    %1 = arith.addi %0, %arg1 : i32
    %c0_i32 = arith.constant 0 : i32
    %c0_i32_0 = arith.constant 0 : i32
    return %arg0, %c0_i32, %1 : i32, i32, i32
  }
  func.func @transform_1(%arg0: i32, %arg1: i32, %arg2: i32) -> (i32, i32, i32, i32) {
    %c0_i32 = arith.constant 0 : i32
    %c0_i32_0 = arith.constant 0 : i32
    %c0_i32_1 = arith.constant 0 : i32
    return %arg0, %arg1, %c0_i32, %c0_i32_0 : i32, i32, i32, i32
  }
}

</mosaic_0001>

<llo_original>
// kernel: tpu_custom_call.1
$region0: #{tpu_custom_call.1}
  #allocation0 [shape = 'u32[]', space=smem, size = 0x4, offset = 0x4, fixed_abs, tag = 'smem constant byte address 0x4 - core index']
  #allocation1 [shape = 'u32[72,128]{1,0:T(1,128)}', space=vmem, size = 0x9000, scoped, tag = 'internal scratch']
  #allocation2 [shape = 'f32[8,1]{1,0:T(8,128)}', space=vmem, size = 0x1000, scoped, tag = 'scratch operand']
  #allocation3 [shape = 'f32[8,1]{1,0:T(8,128)}', space=vmem, size = 0x1000, scoped, tag = 'scratch operand']
  %s0 = inlined_call_operand.hbm [shape: f32[2,8,2048], index: 0, kind: input, shape index: {}]
  %s1 = inlined_call_operand.vmem [shape: f32[2,1,8,2], index: 1, kind: output, shape index: {}]
  %s2 = sld [smem:[#allocation0]]
  $region49: #{tpu_custom_call.1} parent=0
    _
  %s4 = ssub.s32 1, %s2
  %s5 = scalar_select 0, %s4, %s2
  $region1: #{tpu_custom_call.1} parent=0
    #allocation4 [shape = 'u8[16384]{0}', space=vmem, size = 0x4000, scoped, tag = 'input window, operand 0']
    #allocation5 [shape = 's32[2]{0}', space=sflag, size = 0x8, scoped, tag = 'scoped memory for tpu_custom_call.1']
    %6 = vsyncpa [#allocation5], 0
    %s7 = scalar_lea.sflag [#allocation5], 1
    %8 = vsyncpa %s7, 0
    loop: start=0, step=1, limit=18
    $region2: #{tpu_custom_call.1} parent=1 // loop_pre_header
      _
    $region3: #{tpu_custom_call.1} parent=1 // loop_header
      %s10 = sphi 0, %s14
      %p11 = scmp.ge.s32.totalorder %s10, 18
      %s17 = sphi 0, %s36
      %s18 = sphi 0, %s32
      %s19 = sphi 0, %s28
      %s20 = sphi 0, %s17
      %s21 = sphi 0, %s18
      %s22 = sphi 0, %s19
      %s23 = sphi 0, %s20
      %s24 = sphi 0, %s21
      %s25 = sphi 0, %s22
      %s43 = sphi 0, %s45
      %s46 = sphi 0, %s43
      %s47 = sphi 0, %s46
      %s63 = sphi 0, %s47
      %s71 = sphi 0, %s73
      %s74 = sphi 0, %s71
      %s75 = sphi 0, %s74
      %s91 = sphi 0, %s75
    $region4: #{tpu_custom_call.1} parent=1 // loop_header_branch
      %13 = sbr.rel (%p11) target = $region8
    $region5: #{tpu_custom_call.1} parent=1 // loop_body
      %s15 = ssub.s32 %s10, 1
      %s16 = ssub.s32 %s10, 2
      %s26 = sadd.s32 1, %s19
      %p27 = scmp.ge.s32.totalorder %s26, 8
      %s28 = scalar_select %p27, 0, %s26
      %s29 = sadd.s32 1, %s18
      %s30 = scalar_select %p27, %s29, %s18
      %p31 = scmp.ge.s32.totalorder %s30, 1
      %s32 = scalar_select %p31, 0, %s30
      %s33 = sadd.s32 1, %s17
      %s34 = scalar_select %p31, %s33, %s17
      %p35 = scmp.ge.s32.totalorder %s34, 2
      %s36 = scalar_select %p35, 0, %s34
      %s37 = sadd.s32 %s19, %s18
      %s38 = sadd.s32 %s28, %s32
      %s39 = ssub.s32 %s17, %s36
      %s40 = ssub.s32 %s37, %s38
      %s41 = sor.u32 %s39, %s40
      %p42 = scmp.eq.s32.totalorder %s41, 0
      %s44 = sadd.s32 %s43, 1
      %s45 = scalar_select %p42, %s43, %s44
      %p48 = pneg %p42
      %p49 = scmp.eq.s32.totalorder %s10, 15
      %p50 = por %p48, %p49
      %p51 = scmp.ne.s32.totalorder %s43, %s46
      %p52 = scmp.eq.s32.totalorder %s10, 0
      %p53 = por %p51, %p52
      %p54 = scmp.ne.s32.totalorder %s43, %s46
      %p55 = scmp.eq.s32.totalorder %s15, 15
      %p56 = por %p54, %p55
      %p57 = scmp.ne.s32.totalorder %s46, %s47
      %p58 = scmp.eq.s32.totalorder %s15, 0
      %p59 = por %p57, %p58
      %p60 = scmp.ne.s32.totalorder %s46, %s47
      %p61 = scmp.eq.s32.totalorder %s16, 15
      %p62 = por %p60, %p61
      %p64 = scmp.ne.s32.totalorder %s47, %s63
      %p65 = scmp.eq.s32.totalorder %s16, 0
      %p66 = por %p64, %p65
      %s67 = ssub.s32 %s17, %s36
      %s68 = ssub.s32 %s18, %s32
      %s69 = sor.u32 %s67, %s68
      %p70 = scmp.eq.s32.totalorder %s69, 0
      %s72 = sadd.s32 %s71, 1
      %s73 = scalar_select %p70, %s71, %s72
      %p76 = pneg %p70
      %p77 = scmp.eq.s32.totalorder %s10, 15
      %p78 = por %p76, %p77
      %p79 = scmp.ne.s32.totalorder %s71, %s74
      %p80 = scmp.eq.s32.totalorder %s10, 0
      %p81 = por %p79, %p80
      %p82 = scmp.ne.s32.totalorder %s71, %s74
      %p83 = scmp.eq.s32.totalorder %s15, 15
      %p84 = por %p82, %p83
      %p85 = scmp.ne.s32.totalorder %s74, %s75
      %p86 = scmp.eq.s32.totalorder %s15, 0
      %p87 = por %p85, %p86
      %p88 = scmp.ne.s32.totalorder %s74, %s75
      %p89 = scmp.eq.s32.totalorder %s16, 15
      %p90 = por %p88, %p89
      %p92 = scmp.ne.s32.totalorder %s75, %s91
      %p93 = scmp.eq.s32.totalorder %s16, 0
      %p94 = por %p92, %p93
      %p95 = scmp.le.s32.totalorder 1, %s10
      %p96 = scmp.lt.s32.totalorder %s10, 17
      %p97 = pnand %p95, %p96
      %p98 = pneg %p97
      // Predicated region
      $region9: #{tpu_custom_call.1} parent=5 // pred_check
        _
      $region10: #{tpu_custom_call.1} parent=5 // pred_check_branch
        %100 = sbr.rel (%p97) target = $region12
      $region11: #{tpu_custom_call.1} parent=5 // pred_region
        %s101 = ssub.s32 %s10, 1
      $region12: #{tpu_custom_call.1} parent=5 // pred_fallthru
        _
      %p102 = scmp.lt.s32.totalorder %s10, 16
      // Predicated region
      $region13: #{tpu_custom_call.1} parent=5 // pred_check
        %p103 = pneg %p102
      $region14: #{tpu_custom_call.1} parent=5 // pred_check_branch
        %105 = sbr.rel (%p103) target = $region16
      $region15: #{tpu_custom_call.1} parent=5 // pred_region
        // Predicated region
        $region17: #{tpu_custom_call.1} parent=15 // pred_check
          %p106 = pneg %p53
        $region18: #{tpu_custom_call.1} parent=15 // pred_check_branch
          %108 = sbr.rel (%p106) target = $region20
        $region19: #{tpu_custom_call.1} parent=15 // pred_region
          %s109 = sand.u32 %s43, 1
          %s110 = scalar_lea.sflag [#allocation5], %s109
          %s111 = sand.u32 %s43, 1
          %s112 = smul.addr %s111, 16
          %s113 = scalar_lea.vmem [#allocation4], %s112
          %s114 = sadd.s32 %s19, %s18
          %s115 = smul.u32 2, %s114
          %117 = vsyncadd %s110, 0
          %s118 = smul.addr %s17, 16
          %s119 = sadd.s32 %s115, %s118
          %s120 = smul.addr %s119, 8
          %s121 = scalar_lea.hbm %s0, %s120
          %s123 = sshll.u32 %s121, 4
          %s124 = int_to_ptr.hbm [resolvable:$true] %s123
          %s125 = sshll.u32 %s113, 4
          %s126 = int_to_ptr.vmem [resolvable:$true] %s125
          %128 = dma.hbm_to_vmem [thread:$0]  %s124, 256, %s126, %s110
        $region20: #{tpu_custom_call.1} parent=15 // pred_fallthru
          _
      $region16: #{tpu_custom_call.1} parent=5 // pred_fallthru
        _
      %p129 = scmp.le.s32.totalorder 1, %s10
      %p130 = scmp.lt.s32.totalorder %s10, 17
      %p131 = pnand %p129, %p130
      %p132 = pneg %p131
      // Predicated region
      $region21: #{tpu_custom_call.1} parent=5 // pred_check
        _
      $region22: #{tpu_custom_call.1} parent=5 // pred_check_branch
        %134 = sbr.rel (%p131) target = $region24
      $region23: #{tpu_custom_call.1} parent=5 // pred_region
        %s135 = ssub.s32 %s10, 1
        %s136 = sand.u32 %s46, 1
        %s137 = scalar_lea.sflag [#allocation5], %s136
        %s138 = sand.u32 %s46, 1
        %s139 = smul.addr %s138, 16
        %s140 = scalar_lea.vmem [#allocation4], %s139
        // Predicated region
        $region25: #{tpu_custom_call.1} parent=23 // pred_check
          %p141 = pneg %p59
        $region26: #{tpu_custom_call.1} parent=23 // pred_check_branch
          %143 = sbr.rel (%p141) target = $region28
        $region27: #{tpu_custom_call.1} parent=23 // pred_region
          %145 = dma.done %s137, 256
        $region28: #{tpu_custom_call.1} parent=23 // pred_fallthru
          _
        %s146 = sand.u32 %s46, 1
        %s147 = scalar_lea.sflag [#allocation5], %s146
        %s148 = sand.u32 %s46, 1
        %s149 = smul.addr %s148, 16
        %s150 = scalar_lea.vmem [#allocation4], %s149
        %p151 = pneg %p59
        %p152 = pneg %p56
        %p153 = pneg %p87
        %p154 = pneg %p84
        %p155 = scmp.lt.s32.totalorder %s20, 1
        %s156 = scalar_select %p155, %s20, 1
        %p157 = scmp.lt.s32.totalorder %s21, 0
        %s158 = scalar_select %p157, %s21, 0
        %s159 = sadd.s32 %s158, %s156
        %s160 = smul.addr %s159, 8
        %s161 = scalar_lea.vmem %s1, %s160
        %s162 = sadd.s32 %s22, %s21
        %s163 = smul.u32 2, %s162
        %p164 = scmp.lt.s32.totalorder %s20, 1
        %s165 = scalar_select %p164, %s20, 1
        %p166 = scmp.lt.s32.totalorder %s21, 0
        %s167 = scalar_select %p166, %s21, 0
        %s168 = sadd.s32 %s167, %s165
        %s169 = smul.addr %s168, 8
        %s170 = scalar_lea.vmem %s1, %s169
        %p171 = scmp.eq.s32.totalorder %s22, 0
        // Predicated region
        $region29: #{tpu_custom_call.1} parent=23 // pred_check
          %p172 = pneg %p171
        $region30: #{tpu_custom_call.1} parent=23 // pred_check_branch
          %174 = sbr.rel (%p172) target = $region32
        $region31: #{tpu_custom_call.1} parent=23 // pred_region
          %vm175 = vcmask 7168
          %176 = vst.msk [vmem:[#allocation2] sm:$0xff] %vm175, 0.0
          %177 = vst.msk [vmem:[#allocation3] sm:$0xff] %vm175, 0.0
        $region32: #{tpu_custom_call.1} parent=23 // pred_fallthru
          _
        %v178 = vld [vmem:[%s140] sm:$0xff]
        %v179 = vld [vmem:[%s140 + $0x8] sm:$0xff]
        %v180 = vld [vmem:[#allocation2] sm:$0xff]
        %v181 = vadd.f32 %v178, %v179
        %182 = vadd.xlane.f32.xlu0 %v181
        %v183 = vpop.xlane.xlu0 %182
        %v184 = vadd.f32 %v180, %v183
        %vm185 = vcmask 7168
        %186 = vst.msk [vmem:[#allocation2] sm:$0xff] %vm185, %v184
        %v187 = vld [vmem:[#allocation3] sm:$0xff]
        %v188 = vmul.f32 %v178, %v178
        %v189 = vmul.f32 %v179, %v179
        %v190 = vadd.f32 %v188, %v189
        %191 = vadd.xlane.f32.xlu0 %v190
        %v192 = vpop.xlane.xlu0 %191
        %v193 = vadd.f32 %v187, %v192
        %194 = vst.msk [vmem:[#allocation3] sm:$0xff] %vm185, %v193
        %p195 = scmp.eq.s32.totalorder %s22, 7
        // Predicated region
        $region33: #{tpu_custom_call.1} parent=23 // pred_check
          %p196 = pneg %p195
        $region34: #{tpu_custom_call.1} parent=23 // pred_check_branch
          %198 = sbr.rel (%p196) target = $region36
        $region35: #{tpu_custom_call.1} parent=23 // pred_region
          %v199 = vld [vmem:[#allocation2] sm:$0xff]
          %200 = vst.msk [vmem:[%s170] sm:$0xff] %vm185, %v199
          %v201 = vld [vmem:[#allocation3] sm:$0xff]
          %203 = vrot.lane.b32.xlu0 %v201, 1
          %v204 = vpop.permute.xlu0 %203
          %vm206 = vcmask 15368
          %207 = vst.msk [vmem:[%s170] sm:$0xff] %vm206, %v204
        $region36: #{tpu_custom_call.1} parent=23 // pred_fallthru
          _
        %p208 = scmp.lt.s32.totalorder %s20, 1
        %s209 = scalar_select %p208, %s20, 1
        %p210 = scmp.lt.s32.totalorder %s21, 0
        %s211 = scalar_select %p210, %s21, 0
        %s212 = sadd.s32 %s211, %s209
        %s213 = smul.addr %s212, 8
        %s214 = scalar_lea.vmem %s1, %s213
        // Predicated region
        $region37: #{tpu_custom_call.1} parent=23 // pred_check
          %p215 = pneg %p84
        $region38: #{tpu_custom_call.1} parent=23 // pred_check_branch
          %217 = sbr.rel (%p215) target = $region40
        $region39: #{tpu_custom_call.1} parent=23 // pred_region
          _
        $region40: #{tpu_custom_call.1} parent=23 // pred_fallthru
          _
      $region24: #{tpu_custom_call.1} parent=5 // pred_fallthru
        _
      %p218 = scmp.le.s32.totalorder 2, %s10
      // Predicated region
      $region41: #{tpu_custom_call.1} parent=5 // pred_check
        %p219 = pneg %p218
      $region42: #{tpu_custom_call.1} parent=5 // pred_check_branch
        %221 = sbr.rel (%p219) target = $region44
      $region43: #{tpu_custom_call.1} parent=5 // pred_region
        %s222 = ssub.s32 %s10, 2
        // Predicated region
        $region45: #{tpu_custom_call.1} parent=43 // pred_check
          %p223 = pneg %p90
        $region46: #{tpu_custom_call.1} parent=43 // pred_check_branch
          %225 = sbr.rel (%p223) target = $region48
        $region47: #{tpu_custom_call.1} parent=43 // pred_region
          %p226 = scmp.lt.s32.totalorder %s23, 1
          %s227 = scalar_select %p226, %s23, 1
          %p228 = scmp.lt.s32.totalorder %s24, 0
          %s229 = scalar_select %p228, %s24, 0
          %s230 = sadd.s32 %s229, %s227
          %s231 = smul.addr %s230, 8
          %s232 = scalar_lea.vmem %s1, %s231
        $region48: #{tpu_custom_call.1} parent=43 // pred_fallthru
          _
      $region44: #{tpu_custom_call.1} parent=5 // pred_fallthru
        _
    $region6: #{tpu_custom_call.1} parent=1 // loop_footer
      %s14 = sadd.s32 1, %s10
    $region7: #{tpu_custom_call.1} parent=1 // loop_footer_branch
      %9 = sbr.rel target = $region3
    $region8: #{tpu_custom_call.1} parent=1 // loop_exit
      _
    %233 = vsyncpa [#allocation5], 1
    %s234 = scalar_lea.sflag [#allocation5], 1
    %235 = vsyncpa %s234, 1

</llo_original>
